<compile_context>
chip_gen: v7x
topology: tpu7x:2x2x1
jax: 0.10.0
libtpu: 0.0.40
codegen_flags: <defaults>
</compile_context>

<pallas_src>
import jax
import jax.numpy as jnp
from jax.experimental import pallas as pl
from jax.experimental.pallas import tpu as pltpu


def _round_up(x: int, m: int) -> int:
    return ((x + m - 1) // m) * m


def _cdiv(a: int, b: int) -> int:
    return (a + b - 1) // b


def _device_vmem_bytes() -> int:
    try:
        return int(pltpu.get_tpu_info().vmem_capacity_bytes)
    except Exception:
        return 64 << 20  # conservative per-TensorCore default (v7x)


def mlp_kernel(x_ref, w1_ref, b1_ref, w2_ref, b2_ref, o_ref, acc_ref):
    k = pl.program_id(1)

    @pl.when(k == 0)
    def _():
        acc_ref[...] = jnp.zeros_like(acc_ref)

    # fc1 partial: (tm, inp) @ (inp, tk) on the MXU, f32 accumulate.
    h = jnp.dot(x_ref[...], w1_ref[...], preferred_element_type=jnp.float32)
    # Fused epilogue: bias + ReLU + cast for the second MXU pass -> only one
    # (tm, tk)-sized value stays live between the two matmuls.
    h = jnp.maximum(h + b1_ref[...], 0.0).astype(w2_ref.dtype)
    # fc2 partial: (tm, tk) @ (tk, out_p), accumulated across hid tiles.
    acc_ref[...] += jnp.dot(h, w2_ref[...], preferred_element_type=jnp.float32)

    @pl.when(k == pl.num_programs(1) - 1)
    def _():
        o_ref[...] = (acc_ref[...] + b2_ref[...]).astype(o_ref.dtype)


def prepare_mlp_params(w1, b1, w2, b2, *, block_hidden=512):
    """Pad parameters ONCE (outside the hot path).

    w1: (inp, hid), b1: (hid,), w2: (hid, out), b2: (out,).
    Weights are stored pre-transposed relative to PyTorch's (out, in) layout.
    Zero-padding of hid/out is numerically exact (padded w cols/rows are 0,
    padded biases 0, ReLU(0)=0 contributes nothing to the fc2 accumulation).
    """
    inp, hid = w1.shape
    out = w2.shape[1]

    hid_128 = _round_up(hid, 128)
    num_k = _cdiv(hid_128, _round_up(block_hidden, 128))
    tk = _round_up(_cdiv(hid_128, num_k), 128)   # lane-aligned hid tile
    hid_p = num_k * tk
    out_p = _round_up(out, 128)                  # lane-dense output stores

    w1_p = jnp.zeros((inp, hid_p), w1.dtype).at[:, :hid].set(w1)
    b1_p = jnp.zeros((1, hid_p), b1.dtype).at[0, :hid].set(b1)
    w2_p = jnp.zeros((hid_p, out_p), w2.dtype).at[:hid, :out].set(w2)
    b2_p = jnp.zeros((1, out_p), b2.dtype).at[0, :out].set(b2)
    return dict(w1=w1_p, b1=b1_p, w2=w2_p, b2=b2_p,
                out_features=out, block_hidden=tk)


def mlp_forward(x, params, *, block_batch=256):
    """x: (B, inp); params from prepare_mlp_params. Returns (B, out)."""
    w1_p, b1_p = params["w1"], params["b1"]
    w2_p, b2_p = params["w2"], params["b2"]
    out = params["out_features"]
    tk = params["block_hidden"]

    B, inp = x.shape
    hid_p = w1_p.shape[1]
    out_p = w2_p.shape[1]
    assert w1_p.shape[0] == inp and hid_p % tk == 0

    dtype = x.dtype
    isz = jnp.dtype(dtype).itemsize
    wsz = jnp.dtype(w1_p.dtype).itemsize

    # dtype-aware sublane multiple (f32: 8, bf16: 16, int8/fp8: 32).
    sub = {4: 8, 2: 16, 1: 32}.get(isz, 8)
    tm = max(sub, min(_round_up(block_batch, sub), _round_up(B, sub)))

    grid = (pl.cdiv(B, tm), hid_p // tk)

    # VMEM budget: double-buffered streamed tiles + resident acc + epilogue temp.
    inp_l = _round_up(inp, 128)
    est = (
        2 * tm * inp_l * isz        # x tile (double-buffered)
        + 2 * inp_l * tk * wsz      # w1 slice
        + 2 * 8 * tk * 4            # b1 slice (sublane-padded)
        + 2 * tk * out_p * wsz      # w2 slice
        + 2 * 8 * out_p * 4         # b2
        + 2 * tm * out_p * isz      # out tile
        + tm * out_p * 4            # f32 accumulator scratch
        + tm * tk * (4 + wsz)       # fused epilogue temp (f32 h + cast)
    )
    vmem_limit = min(max(int(est * 1.5), 32 << 20),
                     int(0.9 * _device_vmem_bytes()))
    # TODO(synk): for very large `inp`, additionally tile the fc1 K dimension.

    y_p = pl.pallas_call(
        mlp_kernel,
        out_shape=jax.ShapeDtypeStruct((B, out_p), dtype),
        grid_spec=pltpu.PrefetchScalarGridSpec(
            num_scalar_prefetch=0,
            grid=grid,
            in_specs=[
                pl.BlockSpec((tm, inp),   lambda i, k: (i, 0)),  # x: batch-tiled, unpadded
                pl.BlockSpec((inp, tk),   lambda i, k: (0, k)),  # w1 slice (streamed)
                pl.BlockSpec((1, tk),     lambda i, k: (0, k)),  # b1 slice
                pl.BlockSpec((tk, out_p), lambda i, k: (k, 0)),  # w2 slice (streamed)
                pl.BlockSpec((1, out_p),  lambda i, k: (0, 0)),  # b2 (fetched once)
            ],
            out_specs=pl.BlockSpec((tm, out_p), lambda i, k: (i, 0)),
            scratch_shapes=[pltpu.VMEM((tm, out_p), jnp.float32)],
        ),
        compiler_params=pltpu.CompilerParams(
            dimension_semantics=("parallel", "arbitrary"),
            vmem_limit_bytes=vmem_limit,
        ),
    )(x, w1_p, b1_p, w2_p, b2_p)

    return y_p if out_p == out else y_p[:, :out]


def init_linear_params(key, in_features, out_features, dtype=jnp.float32):
    """PyTorch nn.Linear default init: U(-1/sqrt(fan_in), 1/sqrt(fan_in))."""
    kw, kb = jax.random.split(key)
    bound = 1.0 / jnp.sqrt(jnp.array(in_features, dtype))
    # Stored as (in, out), i.e. transposed relative to PyTorch's (out, in).
    w = jax.random.uniform(kw, (in_features, out_features), dtype,
                           minval=-bound, maxval=bound)
    b = jax.random.uniform(kb, (out_features,), dtype,
                           minval=-bound, maxval=bound)
    return w, b


if __name__ == "__main__":
    # Small shapes consistent with the module (two Linears + ReLU), chosen to
    # exercise every kernel path: batch=40 with block_batch=16 -> 3 batch
    # tiles incl. a partial edge tile; hid=256 with block_hidden=128 -> 2
    # hid-reduction steps through the accumulator; inp=48 (unpadded K) and
    # out=24 (padded to 128 lanes, sliced off outside).
    batch, inp, hid, out = 40, 48, 256, 24

    key = jax.random.PRNGKey(0)
    kx, k1, k2 = jax.random.split(key, 3)

    x = jax.random.normal(kx, (batch, inp), jnp.float32)
    w1, b1 = init_linear_params(k1, inp, hid)
    w2, b2 = init_linear_params(k2, hid, out)

    params = prepare_mlp_params(w1, b1, w2, b2, block_hidden=128)  # pad once
    y = mlp_forward(x, params, block_batch=16)
    y = jax.block_until_ready(y)

    # Reference check in plain JAX (same math as the PyTorch module).
    ref = jnp.maximum(x @ w1 + b1, 0.0) @ w2 + b2
    assert y.shape == (batch, out), y.shape
    err = float(jnp.max(jnp.abs(y - ref)))
    assert jnp.allclose(y, ref, atol=2e-5, rtol=2e-5), err

    print("KERNEL_OK")
</pallas_src>

<mosaic_0001>
module attributes {stable_mosaic.version = 11 : i64} {
  func.func @mlp_kernel(%arg0: i32, %arg1: i32, %arg2: memref<16x48xf32, #tpu.memory_space<vmem>>, %arg3: memref<48x128xf32, #tpu.memory_space<vmem>>, %arg4: memref<1x128xf32, #tpu.memory_space<vmem>>, %arg5: memref<128x128xf32, #tpu.memory_space<vmem>>, %arg6: memref<1x128xf32, #tpu.memory_space<vmem>>, %arg7: memref<16x128xf32, #tpu.memory_space<vmem>>, %arg8: memref<16x128xf32, #tpu.memory_space<vmem>>) attributes {dimension_semantics = [#tpu.dimension_semantics<parallel>, #tpu.dimension_semantics<arbitrary>], iteration_bounds = array<i64: 3, 2>, scalar_prefetch = 0 : i64, scratch_operands = 1 : i64, tpu.core_type = #tpu.core_type<tc>, window_params = [{transform_indices = @transform_0, window_bounds = array<i64: 16, 48>}, {transform_indices = @transform_1, window_bounds = array<i64: 48, 128>}, {transform_indices = @transform_2, window_bounds = array<i64: 1, 128>}, {transform_indices = @transform_3, window_bounds = array<i64: 128, 128>}, {pipeline_mode = #tpu.pipeline_mode<synchronous>, transform_indices = @transform_4, window_bounds = array<i64: 1, 128>}, {transform_indices = @transform_5, window_bounds = array<i64: 16, 128>}]} {
    %c0_i32 = arith.constant 0 : i32
    %0 = arith.cmpi eq, %arg1, %c0_i32 : i32
    %1 = arith.extui %0 : i1 to i32
    %c0_i32_0 = arith.constant 0 : i32
    %2 = arith.cmpi ne, %1, %c0_i32_0 : i32
    scf.if %2 {
      %cst_15 = arith.constant 0.000000e+00 : f32
      %19 = vector.broadcast %cst_15 : f32 to vector<16x128xf32>
      %c0_16 = arith.constant 0 : index
      %c0_17 = arith.constant 0 : index
      %20 = vector.load %arg8[%c0_16, %c0_17] : memref<16x128xf32, #tpu.memory_space<vmem>>, vector<16x128xf32>
      tpu.vector_store %arg8[%c0_16, %c0_17], %19 {strides = array<i32>} : memref<16x128xf32, #tpu.memory_space<vmem>>, vector<16x128xf32>,
    } else {
    }
    %c0 = arith.constant 0 : index
    %c0_1 = arith.constant 0 : index
    %3 = vector.load %arg2[%c0, %c0_1] : memref<16x48xf32, #tpu.memory_space<vmem>>, vector<16x48xf32>
    %c0_2 = arith.constant 0 : index
    %c0_3 = arith.constant 0 : index
    %4 = vector.load %arg3[%c0_2, %c0_3] : memref<48x128xf32, #tpu.memory_space<vmem>>, vector<48x128xf32>
    %cst = arith.constant dense<0.000000e+00> : vector<16x128xf32>
    %5 = tpu.matmul %3, %4, %cst {dimension_numbers = #tpu.dot_dimension_numbers<[1], [0], [0], [1], [0, 0, 1, 1], [], []>} : vector<16x48xf32>, vector<48x128xf32>, vector<16x128xf32> -> vector<16x128xf32>
    %c0_4 = arith.constant 0 : index
    %c0_5 = arith.constant 0 : index
    %6 = vector.load %arg4[%c0_4, %c0_5] : memref<1x128xf32, #tpu.memory_space<vmem>>, vector<1x128xf32>
    %7 = vector.broadcast %6 : vector<1x128xf32> to vector<16x128xf32>
    %8 = arith.addf %5, %7 : vector<16x128xf32>
    %cst_6 = arith.constant 0.000000e+00 : f32
    %9 = vector.broadcast %cst_6 : f32 to vector<16x128xf32>
    %10 = arith.maximumf %8, %9 : vector<16x128xf32>
    %c0_7 = arith.constant 0 : index
    %c0_8 = arith.constant 0 : index
    %11 = vector.load %arg8[%c0_7, %c0_8] : memref<16x128xf32, #tpu.memory_space<vmem>>, vector<16x128xf32>
    %c0_9 = arith.constant 0 : index
    %c0_10 = arith.constant 0 : index
    %12 = vector.load %arg5[%c0_9, %c0_10] : memref<128x128xf32, #tpu.memory_space<vmem>>, vector<128x128xf32>
    %cst_11 = arith.constant dense<0.000000e+00> : vector<16x128xf32>
    %13 = tpu.matmul %10, %12, %cst_11 {dimension_numbers = #tpu.dot_dimension_numbers<[1], [0], [0], [1], [0, 0, 1, 1], [], []>} : vector<16x128xf32>, vector<128x128xf32>, vector<16x128xf32> -> vector<16x128xf32>
    %14 = arith.addf %11, %13 : vector<16x128xf32>
    %c0_12 = arith.constant 0 : index
    %c0_13 = arith.constant 0 : index
    %15 = vector.load %arg8[%c0_12, %c0_13] : memref<16x128xf32, #tpu.memory_space<vmem>>, vector<16x128xf32>
    tpu.vector_store %arg8[%c0_12, %c0_13], %14 {strides = array<i32>} : memref<16x128xf32, #tpu.memory_space<vmem>>, vector<16x128xf32>,
    %c1_i32 = arith.constant 1 : i32
    %16 = arith.cmpi eq, %arg1, %c1_i32 : i32
    %17 = arith.extui %16 : i1 to i32
    %c0_i32_14 = arith.constant 0 : i32
    %18 = arith.cmpi ne, %17, %c0_i32_14 : i32
    scf.if %18 {
      %c0_15 = arith.constant 0 : index
      %c0_16 = arith.constant 0 : index
      %19 = vector.load %arg8[%c0_15, %c0_16] : memref<16x128xf32, #tpu.memory_space<vmem>>, vector<16x128xf32>
      %c0_17 = arith.constant 0 : index
      %c0_18 = arith.constant 0 : index
      %20 = vector.load %arg6[%c0_17, %c0_18] : memref<1x128xf32, #tpu.memory_space<vmem>>, vector<1x128xf32>
      %21 = vector.broadcast %20 : vector<1x128xf32> to vector<16x128xf32>
      %22 = arith.addf %19, %21 : vector<16x128xf32>
      %c0_19 = arith.constant 0 : index
      %c0_20 = arith.constant 0 : index
      %23 = vector.load %arg7[%c0_19, %c0_20] : memref<16x128xf32, #tpu.memory_space<vmem>>, vector<16x128xf32>
      tpu.vector_store %arg7[%c0_19, %c0_20], %22 {strides = array<i32>} : memref<16x128xf32, #tpu.memory_space<vmem>>, vector<16x128xf32>,
    } else {
    }
    return
  }
  func.func @transform_0(%arg0: i32, %arg1: i32) -> (i32, i32) {
    %c0_i32 = arith.constant 0 : i32
    %c0_i32_0 = arith.constant 0 : i32
    return %arg0, %c0_i32 : i32, i32
  }
  func.func @transform_1(%arg0: i32, %arg1: i32) -> (i32, i32) {
    %c0_i32 = arith.constant 0 : i32
    %c0_i32_0 = arith.constant 0 : i32
    return %c0_i32, %arg1 : i32, i32
  }
  func.func @transform_2(%arg0: i32, %arg1: i32) -> (i32, i32) {
    %c0_i32 = arith.constant 0 : i32
    %c0_i32_0 = arith.constant 0 : i32
    return %c0_i32, %arg1 : i32, i32
  }
  func.func @transform_3(%arg0: i32, %arg1: i32) -> (i32, i32) {
    %c0_i32 = arith.constant 0 : i32
    %c0_i32_0 = arith.constant 0 : i32
    return %arg1, %c0_i32 : i32, i32
  }
  func.func @transform_4(%arg0: i32, %arg1: i32) -> (i32, i32) {
    %c0_i32 = arith.constant 0 : i32
    %c0_i32_0 = arith.constant 0 : i32
    %c0_i32_1 = arith.constant 0 : i32
    return %c0_i32, %c0_i32_0 : i32, i32
  }
  func.func @transform_5(%arg0: i32, %arg1: i32) -> (i32, i32) {
    %c0_i32 = arith.constant 0 : i32
    %c0_i32_0 = arith.constant 0 : i32
    return %arg0, %c0_i32 : i32, i32
  }
}

</mosaic_0001>

<llo_original>
// kernel: tpu_custom_call.1
$region0: #{tpu_custom_call.1}
  #allocation0 [shape = 'u32[]', space=smem, size = 0x4, offset = 0x4, fixed_abs, tag = 'smem constant byte address 0x4 - core index']
  #allocation1 [shape = 'u32[144,128]{1,0:T(1,128)}', space=vmem, size = 0x12000, scoped, tag = 'internal scratch']
  #allocation2 [shape = 'f32[16,128]{1,0:T(8,128)}', space=vmem, size = 0x2000, scoped, tag = 'scratch operand']
  %s0 = inlined_call_operand.hbm [shape: f32[40,48], index: 0, kind: input, shape index: {}]
  %s1 = inlined_call_operand.hbm [shape: f32[48,256], index: 1, kind: input, shape index: {}]
  %s2 = inlined_call_operand.vmem [shape: f32[1,256], index: 2, kind: input, shape index: {}]
  %s3 = inlined_call_operand.hbm [shape: f32[256,128], index: 3, kind: input, shape index: {}]
  %s4 = inlined_call_operand.vmem [shape: f32[1,128], index: 4, kind: input, shape index: {}]
  %s5 = inlined_call_operand.hbm [shape: f32[40,128], index: 5, kind: output, shape index: {}]
  %s6 = sld [smem:[#allocation0]]
  $region73: #{tpu_custom_call.1} parent=0
    _
  %s8 = ssub.s32 1, %s6
  %s9 = scalar_select 0, %s8, %s6
  $region1: #{tpu_custom_call.1} parent=0
    #allocation3 [shape = 'u8[16384]{0}', space=vmem, size = 0x4000, scoped, tag = 'input window, operand 0']
    #allocation4 [shape = 's32[2]{0}', space=sflag, size = 0x8, scoped, tag = 'scoped memory for tpu_custom_call.1']
    #allocation5 [shape = 's32[2]{0}', space=sflag, size = 0x8, scoped, tag = 'scoped memory for tpu_custom_call.1']
    #allocation6 [shape = 'u8[49152]{0}', space=vmem, size = 0xc000, scoped, tag = 'input window, operand 1']
    #allocation7 [shape = 's32[2]{0}', space=sflag, size = 0x8, scoped, tag = 'scoped memory for tpu_custom_call.1']
    #allocation8 [shape = 'u8[131072]{0}', space=vmem, size = 0x20000, scoped, tag = 'input window, operand 3']
    #allocation9 [shape = 'u8[16384]{0}', space=vmem, size = 0x4000, scoped, tag = 'output window, operand 0']
    %10 = vsyncpa [#allocation4], 0
    %s11 = scalar_lea.sflag [#allocation4], 1
    %12 = vsyncpa %s11, 0
    %13 = vsyncpa [#allocation7], 0
    %s14 = scalar_lea.sflag [#allocation7], 1
    %15 = vsyncpa %s14, 0
    %16 = vsyncpa [#allocation5], 0
    %s17 = scalar_lea.sflag [#allocation5], 1
    %18 = vsyncpa %s17, 0
    loop: start=0, step=1, limit=8
    $region2: #{tpu_custom_call.1} parent=1 // loop_pre_header
      _
    $region3: #{tpu_custom_call.1} parent=1 // loop_header
      %s20 = sphi 0, %s24
      %p21 = scmp.ge.s32.totalorder %s20, 8
      %s27 = sphi 0, %s39
      %s28 = sphi 0, %s35
      %s29 = sphi 0, %s27
      %s30 = sphi 0, %s28
      %s31 = sphi 0, %s29
      %s32 = sphi 0, %s30
      %s42 = sphi 0, %s44
      %s45 = sphi 0, %s42
      %s46 = sphi 0, %s45
      %s62 = sphi 0, %s46
      %s68 = sphi 0, %s70
      %s71 = sphi 0, %s68
      %s72 = sphi 0, %s71
      %s88 = sphi 0, %s72
      %s94 = sphi 0, %s96
      %s97 = sphi 0, %s94
      %s98 = sphi 0, %s97
      %s114 = sphi 0, %s98
      %s120 = sphi 0, %s122
      %s123 = sphi 0, %s120
      %s124 = sphi 0, %s123
      %s140 = sphi 0, %s124
      %s144 = sphi 0, %s144
      %s146 = sphi 0, %s144
      %s147 = sphi 0, %s146
      %s161 = sphi 0, %s147
      %s167 = sphi 0, %s169
      %s170 = sphi 0, %s167
      %s171 = sphi 0, %s170
      %s187 = sphi 0, %s171
    $region4: #{tpu_custom_call.1} parent=1 // loop_header_branch
      %23 = sbr.rel (%p21) target = $region8
    $region5: #{tpu_custom_call.1} parent=1 // loop_body
      %s25 = ssub.s32 %s20, 1
      %s26 = ssub.s32 %s20, 2
      %s33 = sadd.s32 1, %s28
      %p34 = scmp.ge.s32.totalorder %s33, 2
      %s35 = scalar_select %p34, 0, %s33
      %s36 = sadd.s32 1, %s27
      %s37 = scalar_select %p34, %s36, %s27
      %p38 = scmp.ge.s32.totalorder %s37, 3
      %s39 = scalar_select %p38, 0, %s37
      %s40 = ssub.s32 %s27, %s39
      %p41 = scmp.eq.s32.totalorder %s40, 0
      %s43 = sadd.s32 %s42, 1
      %s44 = scalar_select %p41, %s42, %s43
      %p47 = pneg %p41
      %p48 = scmp.eq.s32.totalorder %s20, 5
      %p49 = por %p47, %p48
      %p50 = scmp.ne.s32.totalorder %s42, %s45
      %p51 = scmp.eq.s32.totalorder %s20, 0
      %p52 = por %p50, %p51
      %p53 = scmp.ne.s32.totalorder %s42, %s45
      %p54 = scmp.eq.s32.totalorder %s25, 5
      %p55 = por %p53, %p54
      %p56 = scmp.ne.s32.totalorder %s45, %s46
      %p57 = scmp.eq.s32.totalorder %s25, 0
      %p58 = por %p56, %p57
      %p59 = scmp.ne.s32.totalorder %s45, %s46
      %p60 = scmp.eq.s32.totalorder %s26, 5
      %p61 = por %p59, %p60
      %p63 = scmp.ne.s32.totalorder %s46, %s62
      %p64 = scmp.eq.s32.totalorder %s26, 0
      %p65 = por %p63, %p64
      %s66 = ssub.s32 %s28, %s35
      %p67 = scmp.eq.s32.totalorder %s66, 0
      %s69 = sadd.s32 %s68, 1
      %s70 = scalar_select %p67, %s68, %s69
      %p73 = pneg %p67
      %p74 = scmp.eq.s32.totalorder %s20, 5
      %p75 = por %p73, %p74
      %p76 = scmp.ne.s32.totalorder %s68, %s71
      %p77 = scmp.eq.s32.totalorder %s20, 0
      %p78 = por %p76, %p77
      %p79 = scmp.ne.s32.totalorder %s68, %s71
      %p80 = scmp.eq.s32.totalorder %s25, 5
      %p81 = por %p79, %p80
      %p82 = scmp.ne.s32.totalorder %s71, %s72
      %p83 = scmp.eq.s32.totalorder %s25, 0
      %p84 = por %p82, %p83
      %p85 = scmp.ne.s32.totalorder %s71, %s72
      %p86 = scmp.eq.s32.totalorder %s26, 5
      %p87 = por %p85, %p86
      %p89 = scmp.ne.s32.totalorder %s72, %s88
      %p90 = scmp.eq.s32.totalorder %s26, 0
      %p91 = por %p89, %p90
      %s92 = ssub.s32 %s28, %s35
      %p93 = scmp.eq.s32.totalorder %s92, 0
      %s95 = sadd.s32 %s94, 1
      %s96 = scalar_select %p93, %s94, %s95
      %p99 = pneg %p93
      %p100 = scmp.eq.s32.totalorder %s20, 5
      %p101 = por %p99, %p100
      %p102 = scmp.ne.s32.totalorder %s94, %s97
      %p103 = scmp.eq.s32.totalorder %s20, 0
      %p104 = por %p102, %p103
      %p105 = scmp.ne.s32.totalorder %s94, %s97
      %p106 = scmp.eq.s32.totalorder %s25, 5
      %p107 = por %p105, %p106
      %p108 = scmp.ne.s32.totalorder %s97, %s98
      %p109 = scmp.eq.s32.totalorder %s25, 0
      %p110 = por %p108, %p109
      %p111 = scmp.ne.s32.totalorder %s97, %s98
      %p112 = scmp.eq.s32.totalorder %s26, 5
      %p113 = por %p111, %p112
      %p115 = scmp.ne.s32.totalorder %s98, %s114
      %p116 = scmp.eq.s32.totalorder %s26, 0
      %p117 = por %p115, %p116
      %s118 = ssub.s32 %s28, %s35
      %p119 = scmp.eq.s32.totalorder %s118, 0
      %s121 = sadd.s32 %s120, 1
      %s122 = scalar_select %p119, %s120, %s121
      %p125 = pneg %p119
      %p126 = scmp.eq.s32.totalorder %s20, 5
      %p127 = por %p125, %p126
      %p128 = scmp.ne.s32.totalorder %s120, %s123
      %p129 = scmp.eq.s32.totalorder %s20, 0
      %p130 = por %p128, %p129
      %p131 = scmp.ne.s32.totalorder %s120, %s123
      %p132 = scmp.eq.s32.totalorder %s25, 5
      %p133 = por %p131, %p132
      %p134 = scmp.ne.s32.totalorder %s123, %s124
      %p135 = scmp.eq.s32.totalorder %s25, 0
      %p136 = por %p134, %p135
      %p137 = scmp.ne.s32.totalorder %s123, %s124
      %p138 = scmp.eq.s32.totalorder %s26, 5
      %p139 = por %p137, %p138
      %p141 = scmp.ne.s32.totalorder %s124, %s140
      %p142 = scmp.eq.s32.totalorder %s26, 0
      %p143 = por %p141, %p142
      %s145 = sadd.s32 %s144, 1
      %p148 = scmp.eq.s32.totalorder %s20, 5
      %p149 = scmp.ne.s32.totalorder %s144, %s146
      %p150 = scmp.eq.s32.totalorder %s20, 0
      %p151 = por %p149, %p150
      %p152 = scmp.ne.s32.totalorder %s144, %s146
      %p153 = scmp.eq.s32.totalorder %s25, 5
      %p154 = por %p152, %p153
      %p155 = scmp.ne.s32.totalorder %s146, %s147
      %p156 = scmp.eq.s32.totalorder %s25, 0
      %p157 = por %p155, %p156
      %p158 = scmp.ne.s32.totalorder %s146, %s147
      %p159 = scmp.eq.s32.totalorder %s26, 5
      %p160 = por %p158, %p159
      %p162 = scmp.ne.s32.totalorder %s147, %s161
      %p163 = scmp.eq.s32.totalorder %s26, 0
      %p164 = por %p162, %p163
      %s165 = ssub.s32 %s27, %s39
      %p166 = scmp.eq.s32.totalorder %s165, 0
      %s168 = sadd.s32 %s167, 1
      %s169 = scalar_select %p166, %s167, %s168
      %p172 = pneg %p166
      %p173 = scmp.eq.s32.totalorder %s20, 5
      %p174 = por %p172, %p173
      %p175 = scmp.ne.s32.totalorder %s167, %s170
      %p176 = scmp.eq.s32.totalorder %s20, 0
      %p177 = por %p175, %p176
      %p178 = scmp.ne.s32.totalorder %s167, %s170
      %p179 = scmp.eq.s32.totalorder %s25, 5
      %p180 = por %p178, %p179
      %p181 = scmp.ne.s32.totalorder %s170, %s171
      %p182 = scmp.eq.s32.totalorder %s25, 0
      %p183 = por %p181, %p182
      %p184 = scmp.ne.s32.totalorder %s170, %s171
      %p185 = scmp.eq.s32.totalorder %s26, 5
      %p186 = por %p184, %p185
      %p188 = scmp.ne.s32.totalorder %s171, %s187
      %p189 = scmp.eq.s32.totalorder %s26, 0
      %p190 = por %p188, %p189
      %p191 = scmp.le.s32.totalorder 1, %s20
      %p192 = scmp.lt.s32.totalorder %s20, 7
      %p193 = pnand %p191, %p192
      %p194 = pneg %p193
      // Predicated region
      $region9: #{tpu_custom_call.1} parent=5 // pred_check
        _
      $region10: #{tpu_custom_call.1} parent=5 // pred_check_branch
        %196 = sbr.rel (%p193) target = $region12
      $region11: #{tpu_custom_call.1} parent=5 // pred_region
        %s197 = ssub.s32 %s20, 1
        // Predicated region
        $region13: #{tpu_custom_call.1} parent=11 // pred_check
          %p198 = pneg %p157
        $region14: #{tpu_custom_call.1} parent=11 // pred_check_branch
          %200 = sbr.rel (%p198) target = $region16
        $region15: #{tpu_custom_call.1} parent=11 // pred_region
          _
        $region16: #{tpu_custom_call.1} parent=11 // pred_fallthru
          _
      $region12: #{tpu_custom_call.1} parent=5 // pred_fallthru
        _
      %p201 = scmp.lt.s32.totalorder %s20, 6
      // Predicated region
      $region17: #{tpu_custom_call.1} parent=5 // pred_check
        %p202 = pneg %p201
      $region18: #{tpu_custom_call.1} parent=5 // pred_check_branch
        %204 = sbr.rel (%p202) target = $region20
      $region19: #{tpu_custom_call.1} parent=5 // pred_region
        // Predicated region
        $region21: #{tpu_custom_call.1} parent=19 // pred_check
          %p205 = pneg %p52
        $region22: #{tpu_custom_call.1} parent=19 // pred_check_branch
          %207 = sbr.rel (%p205) target = $region24
        $region23: #{tpu_custom_call.1} parent=19 // pred_region
          %s208 = sand.u32 %s42, 1
          %s209 = scalar_lea.sflag [#allocation4], %s208
          %s210 = sand.u32 %s42, 1
          %s211 = smul.addr %s210, 16
          %s212 = scalar_lea.vmem [#allocation3], %s211
          %s213 = smul.u32 2, %s27
          %s214 = ssub.s32 5, %s213
          %p215 = scmp.lt.s32.totalorder %s214, 2
          %s216 = scalar_select %p215, %s214, 2
          %s217 = smul.u32 128, %s216
          %s219 = ssub.s32 256, %s217
          %220 = vsyncadd %s209, %s219
          %p221 = scmp.ne.s32.totalorder 0, %s217
          %s222 = smul.addr %s213, 128
          %s223 = scalar_lea.hbm %s0, %s222
          %s224 = smul.u32 8, %s216
          %s225 = sshll.u32 %s212, 4
          %s226 = int_to_ptr.vmem [resolvable:$true] %s225
          %s227 = sshll.u32 %s224, 4
          %231 = dma.hbm_to_vmem [thread:$0]  (%p221), %s223, %s227, %s226, %s209, 128, 128, 8
        $region24: #{tpu_custom_call.1} parent=19 // pred_fallthru
          _
        // Predicated region
        $region25: #{tpu_custom_call.1} parent=19 // pred_check
          %p232 = pneg %p78
        $region26: #{tpu_custom_call.1} parent=19 // pred_check_branch
          %234 = sbr.rel (%p232) target = $region28
        $region27: #{tpu_custom_call.1} parent=19 // pred_region
          %s235 = sand.u32 %s20, 1
          %s236 = scalar_lea.sflag [#allocation7], %s235
          %s237 = sand.u32 %s68, 1
          %s238 = smul.addr %s237, 48
          %s239 = scalar_lea.vmem [#allocation6], %s238
          %s241 = ssub.s32 768, 768
          %242 = vsyncadd %s236, %s241
          %s243 = smul.addr %s28, 128
          %s244 = scalar_lea.hbm %s1, %s243
          %s245 = sshll.u32 %s239, 4
          %s246 = int_to_ptr.vmem [resolvable:$true] %s245
          %251 = dma.hbm_to_vmem [thread:$0]  %s244, 768, %s246, %s236, 256, 128, 8
        $region28: #{tpu_custom_call.1} parent=19 // pred_fallthru
          _
        // Predicated region
        $region29: #{tpu_custom_call.1} parent=19 // pred_check
          %p252 = pneg %p104
        $region30: #{tpu_custom_call.1} parent=19 // pred_check_branch
          %254 = sbr.rel (%p252) target = $region32
        $region31: #{tpu_custom_call.1} parent=19 // pred_region
          %p255 = scmp.lt.s32.totalorder %s28, 1
          %s256 = scalar_select %p255, %s28, 1
          %s257 = scalar_lea.vmem %s2, %s256
        $region32: #{tpu_custom_call.1} parent=19 // pred_fallthru
          _
        // Predicated region
        $region33: #{tpu_custom_call.1} parent=19 // pred_check
          %p258 = pneg %p130
        $region34: #{tpu_custom_call.1} parent=19 // pred_check_branch
          %260 = sbr.rel (%p258) target = $region36
        $region35: #{tpu_custom_call.1} parent=19 // pred_region
          %s261 = sand.u32 %s20, 1
          %s262 = scalar_lea.sflag [#allocation7], %s261
          %s263 = sand.u32 %s120, 1
          %s264 = smul.addr %s263, 128
          %s265 = scalar_lea.vmem [#allocation8], %s264
          %s266 = smul.u32 16, %s28
          %s268 = ssub.s32 2048, 2048
          %269 = vsyncadd %s262, %s268
          %s270 = smul.addr %s266, 128
          %s271 = scalar_lea.hbm %s3, %s270
          %s272 = sshll.u32 %s265, 4
          %s273 = int_to_ptr.vmem [resolvable:$true] %s272
          %278 = dma.hbm_to_vmem [thread:$0]  %s271, 2048, %s273, %s262, 128, 128, 8
        $region36: #{tpu_custom_call.1} parent=19 // pred_fallthru
          _
      $region20: #{tpu_custom_call.1} parent=5 // pred_fallthru
        _
      %p279 = scmp.le.s32.totalorder 1, %s20
      %p280 = scmp.lt.s32.totalorder %s20, 7
      %p281 = pnand %p279, %p280
      %p282 = pneg %p281
      // Predicated region
      $region37: #{tpu_custom_call.1} parent=5 // pred_check
        _
      $region38: #{tpu_custom_call.1} parent=5 // pred_check_branch
        %284 = sbr.rel (%p281) target = $region40
      $region39: #{tpu_custom_call.1} parent=5 // pred_region
        %s285 = ssub.s32 %s20, 1
        %s286 = sand.u32 %s45, 1
        %s287 = scalar_lea.sflag [#allocation4], %s286
        %s288 = sand.u32 %s45, 1
        %s289 = smul.addr %s288, 16
        %s290 = scalar_lea.vmem [#allocation3], %s289
        // Predicated region
        $region41: #{tpu_custom_call.1} parent=39 // pred_check
          %p291 = pneg %p58
        $region42: #{tpu_custom_call.1} parent=39 // pred_check_branch
          %293 = sbr.rel (%p291) target = $region44
        $region43: #{tpu_custom_call.1} parent=39 // pred_region
          %294 = dma.done %s287, 256
        $region44: #{tpu_custom_call.1} parent=39 // pred_fallthru
          _
        %s295 = sand.u32 %s25, 1
        %s296 = scalar_lea.sflag [#allocation7], %s295
        %s297 = sand.u32 %s71, 1
        %s298 = smul.addr %s297, 48
        %s299 = scalar_lea.vmem [#allocation6], %s298
        // Predicated region
        $region45: #{tpu_custom_call.1} parent=39 // pred_check
          %p300 = pneg %p84
        $region46: #{tpu_custom_call.1} parent=39 // pred_check_branch
          %302 = sbr.rel (%p300) target = $region48
        $region47: #{tpu_custom_call.1} parent=39 // pred_region
          %303 = dma.done %s296, 768
        $region48: #{tpu_custom_call.1} parent=39 // pred_fallthru
          _
        %s304 = sand.u32 %s25, 1
        %s305 = scalar_lea.sflag [#allocation7], %s304
        %s306 = sand.u32 %s123, 1
        %s307 = smul.addr %s306, 128
        %s308 = scalar_lea.vmem [#allocation8], %s307
        // Predicated region
        $region49: #{tpu_custom_call.1} parent=39 // pred_check
          %p309 = pneg %p136
        $region50: #{tpu_custom_call.1} parent=39 // pred_check_branch
          %311 = sbr.rel (%p309) target = $region52
        $region51: #{tpu_custom_call.1} parent=39 // pred_region
          %312 = dma.done %s305, 2048
        $region52: #{tpu_custom_call.1} parent=39 // pred_fallthru
          _
        %s313 = sand.u32 %s45, 1
        %s314 = scalar_lea.sflag [#allocation4], %s313
        %s315 = sand.u32 %s45, 1
        %s316 = smul.addr %s315, 16
        %s317 = scalar_lea.vmem [#allocation3], %s316
        %p318 = pneg %p58
        %p319 = pneg %p55
        %s320 = sand.u32 %s25, 1
        %s321 = scalar_lea.sflag [#allocation7], %s320
        %s322 = sand.u32 %s71, 1
        %s323 = smul.addr %s322, 48
        %s324 = scalar_lea.vmem [#allocation6], %s323
        %p325 = pneg %p84
        %p326 = pneg %p81
        %p327 = scmp.lt.s32.totalorder %s30, 1
        %s328 = scalar_select %p327, %s30, 1
        %s329 = scalar_lea.vmem %s2, %s328
        %p330 = pneg %p110
        %p331 = pneg %p107
        %s332 = sand.u32 %s25, 1
        %s333 = scalar_lea.sflag [#allocation7], %s332
        %s334 = sand.u32 %s123, 1
        %s335 = smul.addr %s334, 128
        %s336 = scalar_lea.vmem [#allocation8], %s335
        %p337 = pneg %p136
        %p338 = pneg %p133
        %p339 = pneg %p157
        %p340 = pneg %p154
        %p341 = pneg %p183
        %p342 = pneg %p180
        %s343 = sand.u32 %s170, 1
        %s344 = scalar_lea.sflag [#allocation5], %s343
        %s345 = sand.u32 %s170, 1
        %s346 = smul.addr %s345, 16
        %s347 = scalar_lea.vmem [#allocation9], %s346
        %s348 = smul.u32 2, %s29
        %s349 = ssub.s32 5, %s348
        %p350 = scmp.lt.s32.totalorder %s349, 2
        %s351 = scalar_select %p350, %s349, 2
        %s352 = smul.u32 128, %s351
        %p353 = scmp.lt.s32.totalorder %s30, 1
        %s354 = scalar_select %p353, %s30, 1
        %s355 = scalar_lea.vmem %s2, %s354
        %s356 = smul.u32 16, %s30
        %s357 = smul.u32 2, %s29
        %s358 = ssub.s32 5, %s357
        %p359 = scmp.lt.s32.totalorder %s358, 2
        %s360 = scalar_select %p359, %s358, 2
        %s361 = smul.u32 128, %s360
        %p362 = scmp.eq.s32.totalorder %s30, 0
        // Predicated region
        $region53: #{tpu_custom_call.1} parent=39 // pred_check
          %p363 = pneg %p362
        $region54: #{tpu_custom_call.1} parent=39 // pred_check_branch
          %365 = sbr.rel (%p363) target = $region56
        $region55: #{tpu_custom_call.1} parent=39 // pred_region
          %366 = vst [vmem:[#allocation2] sm:$0xff] 0.0
          %367 = vst [vmem:[#allocation2 + $0x8] sm:$0xff] 0.0
        $region56: #{tpu_custom_call.1} parent=39 // pred_fallthru
          _
        %v368 = vld [vmem:[%s290] sm:$0xff]
        %v369 = vld [vmem:[%s290 + $0x8] sm:$0xff]
        %v370 = vld [vmem:[%s299] sm:$0xff]
        %v371 = vld [vmem:[%s299 + $0x8] sm:$0xff]
        %v372 = vld [vmem:[%s299 + $0x10] sm:$0xff]
        %v373 = vld [vmem:[%s299 + $0x18] sm:$0xff]
        %v374 = vld [vmem:[%s299 + $0x20] sm:$0xff]
        %v375 = vld [vmem:[%s299 + $0x28] sm:$0xff]
        %v376 = vld [vmem:[%s355] sm:$0x1]
        %v378 = vlaneseq
        %v379 = vshrl.u32 %v378, 7
        %v380 = vsub.s32 0, %v379
        %v381 = vrot.slane %v376, %v380
        %vm383 = vcmask 392192
        %v385 = vsel %vm383, %v368, 0
        %v388 = vsel %vm383, %v369, 0
        %390 = vmatprep.subr.mxu0 0.0
        %391 = vmatpush1.msra.mxu0 %v370
        %392 = vmatprep.subr.mxu0 0.0
        %393 = vmatpush1.msra.mxu0 %v371
        %394 = vmatprep.subr.mxu0 0.0
        %395 = vmatpush1.msra.mxu0 %v372
        %396 = vmatprep.subr.mxu0 0.0
        %397 = vmatpush1.msra.mxu0 %v373
        %398 = vmatprep.subr.mxu0 0.0
        %399 = vmatpush1.msra.mxu0 %v374
        %400 = vmatprep.subr.mxu0 0.0
        %401 = vmatpush1.msra.mxu0 %v375
        %402 = vmatprep.subr.mxu0 0.0
        %403 = vmatpush1.msra.mxu0 0.0
        %404 = vmatprep.subr.mxu0 0.0
        %405 = vmatpush1.msra.mxu0 0.0
        %406 = vmatprep.subr.mxu0 0.0
        %407 = vmatpush1.msra.mxu0 0.0
        %408 = vmatprep.subr.mxu0 0.0
        %409 = vmatpush1.msra.mxu0 0.0
        %410 = vmatprep.subr.mxu0 0.0
        %411 = vmatpush1.msra.mxu0 0.0
        %412 = vmatprep.subr.mxu0 0.0
        %413 = vmatpush1.msra.mxu0 0.0
        %414 = vmatprep.subr.mxu0 0.0
        %415 = vmatpush1.msra.mxu0 0.0
        %416 = vmatprep.subr.mxu0 0.0
        %417 = vmatpush1.msra.mxu0 0.0
        %418 = vmatprep.subr.mxu0 0.0
        %419 = vmatpush1.msra.mxu0 0.0
        %420 = vmatprep.subr.mxu0 0.0
        %421 = vmatpush1.msra.mxu0 0.0
        %422 = vmatprep.subr.mxu0 0.0
        %423 = vmatpush1.msra.mxu0 0.0
        %424 = vmatprep.subr.mxu0 0.0
        %425 = vmatpush1.msra.mxu0 0.0
        %426 = vmatprep.subr.mxu0 0.0
        %427 = vmatpush1.msra.mxu0 0.0
        %428 = vmatprep.subr.mxu0 0.0
        %429 = vmatpush1.msra.mxu0 0.0
        %430 = vmatprep.subr.mxu0 0.0
        %431 = vmatpush1.msra.mxu0 0.0
        %432 = vmatprep.subr.mxu0 0.0
        %433 = vmatpush1.msra.mxu0 0.0
        %434 = vmatprep.subr.mxu0 0.0
        %435 = vmatpush1.msra.mxu0 0.0
        %436 = vmatprep.subr.mxu0 0.0
        %437 = vmatpush1.msra.mxu0 0.0
        %438 = vmatprep.subr.mxu0 0.0
        %439 = vmatpush1.msra.mxu0 0.0
        %440 = vmatprep.subr.mxu0 0.0
        %441 = vmatpush1.msra.mxu0 0.0
        %442 = vmatprep.subr.mxu0 0.0
        %443 = vmatpush1.msra.mxu0 0.0
        %444 = vmatprep.subr.mxu0 0.0
        %445 = vmatpush1.msra.mxu0 0.0
        %446 = vmatprep.subr.mxu0 0.0
        %447 = vmatpush1.msra.mxu0 0.0
        %448 = vmatprep.subr.mxu0 0.0
        %449 = vmatpush1.msra.mxu0 0.0
        %450 = vmatprep.subr.mxu0 0.0
        %451 = vmatpush1.msra.mxu0 0.0
        %452 = vmatprep.subr.mxu0 0.0
        %453 = vmatpush1.msra.mxu0 0.0
        %454 = vmatprep.mubr.f32.mxu0 0.0
        %455 = vmatmul.mubr.f32.gmra.mrb[0].mxu0 %v385
        %v456 = vpop.f32.mrb[0].mxu0
        %v457 = vadd.f32 %v381, %v456
        %v458 = vpop.f32.mrb[0].mxu0
        %459 = vmatprep.mubr.f32.mxu0 0.0
        %460 = vmatmul.mubr.f32.gmra.mrb[0].mxu0 %v388
        %v461 = vpop.f32.mrb[0].mxu0
        %v462 = vadd.f32 %v381, %v461
        %v463 = vpop.f32.mrb[0].mxu0
        %464 = vdwg.mxu0
        %v465 = vmax.f32 %v457, 0.0
        %v466 = vmax.f32 %v462, 0.0
        %v467 = vld [vmem:[#allocation2] sm:$0xff]
        %v468 = vld [vmem:[#allocation2 + $0x8] sm:$0xff]
        %v469 = vld [vmem:[%s308] sm:$0xff]
        %v470 = vld [vmem:[%s308 + $0x8] sm:$0xff]
        %v471 = vld [vmem:[%s308 + $0x10] sm:$0xff]
        %v472 = vld [vmem:[%s308 + $0x18] sm:$0xff]
        %v473 = vld [vmem:[%s308 + $0x20] sm:$0xff]
        %v474 = vld [vmem:[%s308 + $0x28] sm:$0xff]
        %v475 = vld [vmem:[%s308 + $0x30] sm:$0xff]
        %v476 = vld [vmem:[%s308 + $0x38] sm:$0xff]
        %v477 = vld [vmem:[%s308 + $0x40] sm:$0xff]
        %v478 = vld [vmem:[%s308 + $0x48] sm:$0xff]
        %v479 = vld [vmem:[%s308 + $0x50] sm:$0xff]
        %v480 = vld [vmem:[%s308 + $0x58] sm:$0xff]
        %v481 = vld [vmem:[%s308 + $0x60] sm:$0xff]
        %v482 = vld [vmem:[%s308 + $0x68] sm:$0xff]
        %v483 = vld [vmem:[%s308 + $0x70] sm:$0xff]
        %v484 = vld [vmem:[%s308 + $0x78] sm:$0xff]
        %485 = vmatprep.subr.mxu0 0.0
        %486 = vmatpush1.msra.mxu0 %v469
        %487 = vmatprep.subr.mxu0 0.0
        %488 = vmatpush1.msra.mxu0 %v470
        %489 = vmatprep.subr.mxu0 0.0
        %490 = vmatpush1.msra.mxu0 %v471
        %491 = vmatprep.subr.mxu0 0.0
        %492 = vmatpush1.msra.mxu0 %v472
        %493 = vmatprep.subr.mxu0 0.0
        %494 = vmatpush1.msra.mxu0 %v473
        %495 = vmatprep.subr.mxu0 0.0
        %496 = vmatpush1.msra.mxu0 %v474
        %497 = vmatprep.subr.mxu0 0.0
        %498 = vmatpush1.msra.mxu0 %v475
        %499 = vmatprep.subr.mxu0 0.0
        %500 = vmatpush1.msra.mxu0 %v476
        %501 = vmatprep.subr.mxu0 0.0
        %502 = vmatpush1.msra.mxu0 %v477
        %503 = vmatprep.subr.mxu0 0.0
        %504 = vmatpush1.msra.mxu0 %v478
        %505 = vmatprep.subr.mxu0 0.0
        %506 = vmatpush1.msra.mxu0 %v479
        %507 = vmatprep.subr.mxu0 0.0
        %508 = vmatpush1.msra.mxu0 %v480
        %509 = vmatprep.subr.mxu0 0.0
        %510 = vmatpush1.msra.mxu0 %v481
        %511 = vmatprep.subr.mxu0 0.0
        %512 = vmatpush1.msra.mxu0 %v482
        %513 = vmatprep.subr.mxu0 0.0
        %514 = vmatpush1.msra.mxu0 %v483
        %515 = vmatprep.subr.mxu0 0.0
        %516 = vmatpush1.msra.mxu0 %v484
        %517 = vmatprep.subr.mxu0 0.0
        %518 = vmatpush1.msra.mxu0 0.0
        %519 = vmatprep.subr.mxu0 0.0
        %520 = vmatpush1.msra.mxu0 0.0
        %521 = vmatprep.subr.mxu0 0.0
        %522 = vmatpush1.msra.mxu0 0.0
        %523 = vmatprep.subr.mxu0 0.0
        %524 = vmatpush1.msra.mxu0 0.0
        %525 = vmatprep.subr.mxu0 0.0
        %526 = vmatpush1.msra.mxu0 0.0
        %527 = vmatprep.subr.mxu0 0.0
        %528 = vmatpush1.msra.mxu0 0.0
        %529 = vmatprep.subr.mxu0 0.0
        %530 = vmatpush1.msra.mxu0 0.0
        %531 = vmatprep.subr.mxu0 0.0
        %532 = vmatpush1.msra.mxu0 0.0
        %533 = vmatprep.subr.mxu0 0.0
        %534 = vmatpush1.msra.mxu0 0.0
        %535 = vmatprep.subr.mxu0 0.0
        %536 = vmatpush1.msra.mxu0 0.0
        %537 = vmatprep.subr.mxu0 0.0
        %538 = vmatpush1.msra.mxu0 0.0
        %539 = vmatprep.subr.mxu0 0.0
        %540 = vmatpush1.msra.mxu0 0.0
        %541 = vmatprep.subr.mxu0 0.0
        %542 = vmatpush1.msra.mxu0 0.0
        %543 = vmatprep.subr.mxu0 0.0
        %544 = vmatpush1.msra.mxu0 0.0
        %545 = vmatprep.subr.mxu0 0.0
        %546 = vmatpush1.msra.mxu0 0.0
        %547 = vmatprep.subr.mxu0 0.0
        %548 = vmatpush1.msra.mxu0 0.0
        %549 = vmatprep.mubr.f32.mxu0 0.0
        %550 = vmatmul.mubr.f32.gmra.mrb[0].mxu0 %v465
        %v551 = vpop.f32.mrb[0].mxu0
        %v552 = vadd.f32 0.0, %v551
        %v553 = vpop.f32.mrb[0].mxu0
        %554 = vmatprep.mubr.f32.mxu0 0.0
        %555 = vmatmul.mubr.f32.gmra.mrb[0].mxu0 %v466
        %v556 = vpop.f32.mrb[0].mxu0
        %v557 = vadd.f32 0.0, %v556
        %v558 = vpop.f32.mrb[0].mxu0
        %559 = vdwg.mxu0
        %v560 = vadd.f32 %v467, %v552
        %v561 = vadd.f32 %v468, %v557
        %562 = vst [vmem:[#allocation2] sm:$0xff] %v560
        %563 = vst [vmem:[#allocation2 + $0x8] sm:$0xff] %v561
        %p564 = scmp.eq.s32.totalorder %s30, 1
        // Predicated region
        $region57: #{tpu_custom_call.1} parent=39 // pred_check
          %p565 = pneg %p564
        $region58: #{tpu_custom_call.1} parent=39 // pred_check_branch
          %567 = sbr.rel (%p565) target = $region60
        $region59: #{tpu_custom_call.1} parent=39 // pred_region
          %v568 = vld [vmem:[#allocation2] sm:$0xff]
          %v569 = vld [vmem:[#allocation2 + $0x8] sm:$0xff]
          %v570 = vld [vmem:[%s4] sm:$0x1]
          %v572 = vlaneseq
          %v573 = vshrl.u32 %v572, 7
          %v574 = vsub.s32 0, %v573
          %v575 = vrot.slane %v570, %v574
          %v577 = vadd.f32 %v568, %v575
          %v578 = vadd.f32 %v569, %v575
          %579 = vst [vmem:[%s347] sm:$0xff] %v577
          %580 = vst [vmem:[%s347 + $0x8] sm:$0xff] %v578
        $region60: #{tpu_custom_call.1} parent=39 // pred_fallthru
          _
        %s581 = sand.u32 %s170, 1
        %s582 = scalar_lea.sflag [#allocation5], %s581
        %s583 = sand.u32 %s170, 1
        %s584 = smul.addr %s583, 16
        %s585 = scalar_lea.vmem [#allocation9], %s584
        // Predicated region
        $region61: #{tpu_custom_call.1} parent=39 // pred_check
          %p586 = pneg %p180
        $region62: #{tpu_custom_call.1} parent=39 // pred_check_branch
          %588 = sbr.rel (%p586) target = $region64
        $region63: #{tpu_custom_call.1} parent=39 // pred_region
          %s589 = smul.u32 2, %s29
          %s590 = ssub.s32 5, %s589
          %p591 = scmp.lt.s32.totalorder %s590, 2
          %s592 = scalar_select %p591, %s590, 2
          %s593 = smul.u32 128, %s592
          %s595 = ssub.s32 256, %s593
          %596 = vsyncadd %s582, %s595
          %p597 = scmp.ne.s32.totalorder 0, %s593
          %s598 = smul.addr %s589, 128
          %s599 = scalar_lea.hbm %s5, %s598
          %s600 = smul.u32 8, %s592
          %s601 = sshll.u32 %s585, 4
          %s602 = int_to_ptr.vmem [resolvable:$true] %s601
          %s603 = sshll.u32 %s600, 4
          %607 = dma.vmem_to_hbm [thread:$0]  (%p597), %s602, %s603, %s599, %s582, 128, 128, 8
        $region64: #{tpu_custom_call.1} parent=39 // pred_fallthru
          _
      $region40: #{tpu_custom_call.1} parent=5 // pred_fallthru
        _
      %p608 = scmp.le.s32.totalorder 2, %s20
      // Predicated region
      $region65: #{tpu_custom_call.1} parent=5 // pred_check
        %p609 = pneg %p608
      $region66: #{tpu_custom_call.1} parent=5 // pred_check_branch
        %611 = sbr.rel (%p609) target = $region68
      $region67: #{tpu_custom_call.1} parent=5 // pred_region
        %s612 = ssub.s32 %s20, 2
        // Predicated region
        $region69: #{tpu_custom_call.1} parent=67 // pred_check
          %p613 = pneg %p186
        $region70: #{tpu_custom_call.1} parent=67 // pred_check_branch
          %615 = sbr.rel (%p613) target = $region72
        $region71: #{tpu_custom_call.1} parent=67 // pred_region
          %s616 = sand.u32 %s171, 1
          %s617 = scalar_lea.sflag [#allocation5], %s616
          %s618 = sand.u32 %s171, 1
          %s619 = smul.addr %s618, 16
          %s620 = scalar_lea.vmem [#allocation9], %s619
          %621 = dma.done %s617, 256
        $region72: #{tpu_custom_call.1} parent=67 // pred_fallthru
          _
      $region68: #{tpu_custom_call.1} parent=5 // pred_fallthru
        _
    $region6: #{tpu_custom_call.1} parent=1 // loop_footer
      %s24 = sadd.s32 1, %s20
    $region7: #{tpu_custom_call.1} parent=1 // loop_footer_branch
      %19 = sbr.rel target = $region3
    $region8: #{tpu_custom_call.1} parent=1 // loop_exit
      _
    %622 = vsyncpa [#allocation4], 1
    %s623 = scalar_lea.sflag [#allocation4], 1
    %624 = vsyncpa %s623, 1
    %625 = vsyncpa [#allocation7], 1
    %s626 = scalar_lea.sflag [#allocation7], 1
    %627 = vsyncpa %s626, 1
    %628 = vsyncpa [#allocation5], 1
    %s629 = scalar_lea.sflag [#allocation5], 1
    %630 = vsyncpa %s629, 1

</llo_original>
